<compile_context>
chip_gen: v7x
topology: tpu7x:2x2x1
jax: 0.10.0
libtpu: 0.0.40
codegen_flags: <defaults>
</compile_context>

<pallas_src>
import math

import jax
import jax.numpy as jnp
from jax.experimental import pallas as pl
from jax.experimental.pallas import tpu as pltpu


def _ctg_kernel(x_ref, w_ref, o_ref):
    # Single lane-dense MXU matmul: (rb, TV) @ (TV, TV), f32 accumulation.
    o_ref[...] = jnp.dot(
        x_ref[...], w_ref[...], preferred_element_type=jnp.float32
    ).astype(o_ref.dtype)


def _composed_weight(T_param, A_param, Tmask, Amask):
    """Fold both einsums into a single (T*V, T*V) weight (batch-invariant)."""
    V, Tdim, _ = T_param.shape
    TV = Tdim * V
    Tt = (Tmask * T_param).astype(jnp.float32)   # (V, T, T), Tt[v, t, q]
    Aa = (Amask * A_param).astype(jnp.float32)   # (T, V, V), Aa[q, v, w]
    eye_V = jnp.eye(V, dtype=jnp.float32)
    eye_T = jnp.eye(Tdim, dtype=jnp.float32)
    # W1[(t, v'), (q, v)] = Tt[v, t, q] * delta(v', v)   -- 'nctv,vtq->ncqv'
    W1 = (jnp.transpose(Tt, (1, 2, 0))[:, None, :, :]
          * eye_V[None, :, None, :]).reshape(TV, TV)
    # W2[(q', v), (q, w)] = Aa[q, v, w] * delta(q', q)   -- 'nctv,tvw->nctw'
    W2 = (eye_T[:, None, :, None]
          * jnp.transpose(Aa, (1, 0, 2))[None, :, :, :]).reshape(TV, TV)
    # Exact by matmul associativity: (x @ W1) @ W2 == x @ (W1 @ W2).
    return jnp.dot(W1, W2, preferred_element_type=jnp.float32)   # one-off TV^3


def conv_temporal_graphical(x, T_param, A_param, Tmask, Amask, *,
                            row_block=2048, activation_dtype=None,
                            use_pallas=None):
    """x: (N, C, T, V); T_param/Tmask: (V, T, T); A_param/Amask: (T, V, V)."""
    N, C, Tdim, V = x.shape
    TV = Tdim * V
    rows = N * C

    Wc = _composed_weight(T_param, A_param, Tmask, Amask)

    compute_dtype = activation_dtype if activation_dtype is not None else x.dtype
    x_flat = x.reshape(rows, TV).astype(compute_dtype)
    w = Wc.astype(compute_dtype)

    # Tiny-problem bypass: fixed pallas_call/DMA setup dwarfs one small matmul.
    if use_pallas is None:
        use_pallas = rows >= 512
    if not use_pallas:
        out_flat = jnp.dot(x_flat, w, preferred_element_type=jnp.float32)
        return out_flat.astype(x.dtype).reshape(N, C, Tdim, V)

    # Row-tile selection: large tiles to amortize per-step overhead, but keep
    # >= 2 grid steps when possible so the "parallel" axis shards across both
    # v7x TensorCores. No divisibility padding -- Pallas masks the ragged tail.
    rows_aligned = ((rows + 7) // 8) * 8
    if rows_aligned >= 16:
        half = (rows_aligned // 2) // 8 * 8
        rb = max(8, min(row_block, half))
    else:
        rb = rows_aligned
    grid = pl.cdiv(rows, rb)

    in_bytes = jnp.dtype(compute_dtype).itemsize
    out_bytes = jnp.dtype(x.dtype).itemsize
    cost = pl.CostEstimate(
        flops=2 * rows * TV * TV,
        transcendentals=0,
        bytes_accessed=rows * TV * (in_bytes + out_bytes) + TV * TV * in_bytes,
    )

    out_flat = pl.pallas_call(
        _ctg_kernel,
        out_shape=jax.ShapeDtypeStruct((rows, TV), x.dtype),
        grid=(grid,),
        in_specs=[
            pl.BlockSpec((rb, TV), lambda i: (i, 0)),   # activation rows stream
            pl.BlockSpec((TV, TV), lambda i: (0, 0)),   # composed weight, VMEM-resident
        ],
        out_specs=pl.BlockSpec((rb, TV), lambda i: (i, 0)),
        compiler_params=pltpu.CompilerParams(
            dimension_semantics=("parallel",)),
        cost_estimate=cost,
    )(x_flat, w)

    return out_flat.reshape(N, C, Tdim, V)


def _reference(x, T_param, A_param, Tmask, Amask):
    Tt = Tmask * T_param
    Aa = Amask * A_param
    y = jnp.einsum('nctv,vtq->ncqv', x, Tt)
    return jnp.einsum('nctv,tvw->nctw', y, Aa)


if __name__ == "__main__":
    # Small shapes consistent with the module: N batch, C channels, T time, V joints.
    N, C, Tdim, V = 2, 4, 8, 16

    key = jax.random.PRNGKey(0)
    k_a, k_t, k_x, k_am, k_tm = jax.random.split(key, 5)

    # Deterministic param init mirroring the PyTorch __init__.
    stdv_a = 1.0 / math.sqrt(V)
    A_param = jax.random.uniform(k_a, (Tdim, V, V), jnp.float32, -stdv_a, stdv_a)
    stdv_t = 1.0 / math.sqrt(Tdim)
    T_param = jax.random.uniform(k_t, (V, Tdim, Tdim), jnp.float32, -stdv_t, stdv_t)

    x = jax.random.normal(k_x, (N, C, Tdim, V), jnp.float32)
    Amask = (jax.random.uniform(k_am, (Tdim, V, V)) > 0.3).astype(jnp.float32)
    Tmask = (jax.random.uniform(k_tm, (V, Tdim, Tdim)) > 0.3).astype(jnp.float32)

    # Force the Pallas path at this tiny size so the kernel itself is exercised.
    out = conv_temporal_graphical(x, T_param, A_param, Tmask, Amask, use_pallas=True)
    out = jax.block_until_ready(out)
    ref = _reference(x, T_param, A_param, Tmask, Amask)
    assert out.shape == (N, C, Tdim, V)
    assert jnp.allclose(out, ref, atol=1e-4, rtol=1e-4), float(jnp.max(jnp.abs(out - ref)))

    # Also exercise the multi-step grid + ragged-final-block path (no pad copy).
    N2, C2 = 3, 24                       # 72 rows -> rb=32, grid=3, ragged tail
    x2 = jax.random.normal(jax.random.PRNGKey(1), (N2, C2, Tdim, V), jnp.float32)
    out2 = jax.block_until_ready(
        conv_temporal_graphical(x2, T_param, A_param, Tmask, Amask,
                                row_block=32, use_pallas=True))
    ref2 = _reference(x2, T_param, A_param, Tmask, Amask)
    assert jnp.allclose(out2, ref2, atol=1e-4, rtol=1e-4), \
        float(jnp.max(jnp.abs(out2 - ref2)))

    print("KERNEL_OK")
</pallas_src>

<mosaic_0001>
module attributes {stable_mosaic.version = 11 : i64} {
  func.func @_ctg_kernel(%arg0: i32, %arg1: memref<8x128xf32, #tpu.memory_space<vmem>>, %arg2: memref<128x128xf32, #tpu.memory_space<vmem>>, %arg3: memref<8x128xf32, #tpu.memory_space<vmem>>) attributes {dimension_semantics = [#tpu.dimension_semantics<parallel>], iteration_bounds = array<i64: 1>, scalar_prefetch = 0 : i64, scratch_operands = 0 : i64, tpu.core_type = #tpu.core_type<tc>, window_params = [{transform_indices = @transform_0, window_bounds = array<i64: 8, 128>}, {pipeline_mode = #tpu.pipeline_mode<synchronous>, transform_indices = @transform_1, window_bounds = array<i64: 128, 128>}, {transform_indices = @transform_2, window_bounds = array<i64: 8, 128>}]} {
    %c0 = arith.constant 0 : index
    %c0_0 = arith.constant 0 : index
    %0 = vector.load %arg1[%c0, %c0_0] : memref<8x128xf32, #tpu.memory_space<vmem>>, vector<8x128xf32>
    %c0_1 = arith.constant 0 : index
    %c0_2 = arith.constant 0 : index
    %1 = vector.load %arg2[%c0_1, %c0_2] : memref<128x128xf32, #tpu.memory_space<vmem>>, vector<128x128xf32>
    %cst = arith.constant dense<0.000000e+00> : vector<8x128xf32>
    %2 = tpu.matmul %0, %1, %cst {dimension_numbers = #tpu.dot_dimension_numbers<[1], [0], [0], [1], [0, 0, 1, 1], [], []>} : vector<8x128xf32>, vector<128x128xf32>, vector<8x128xf32> -> vector<8x128xf32>
    %c0_3 = arith.constant 0 : index
    %c0_4 = arith.constant 0 : index
    %3 = vector.load %arg3[%c0_3, %c0_4] : memref<8x128xf32, #tpu.memory_space<vmem>>, vector<8x128xf32>
    tpu.vector_store %arg3[%c0_3, %c0_4], %2 {strides = array<i32>} : memref<8x128xf32, #tpu.memory_space<vmem>>, vector<8x128xf32>,
    return
  }
  func.func @transform_0(%arg0: i32) -> (i32, i32) {
    %c0_i32 = arith.constant 0 : i32
    %c0_i32_0 = arith.constant 0 : i32
    return %arg0, %c0_i32 : i32, i32
  }
  func.func @transform_1(%arg0: i32) -> (i32, i32) {
    %c0_i32 = arith.constant 0 : i32
    %c0_i32_0 = arith.constant 0 : i32
    %c0_i32_1 = arith.constant 0 : i32
    return %c0_i32, %c0_i32_0 : i32, i32
  }
  func.func @transform_2(%arg0: i32) -> (i32, i32) {
    %c0_i32 = arith.constant 0 : i32
    %c0_i32_0 = arith.constant 0 : i32
    return %arg0, %c0_i32 : i32, i32
  }
}

</mosaic_0001>

<llo_original>
// kernel: tpu_custom_call.1
$region0: #{tpu_custom_call.1}
  #allocation0 [shape = 'u32[]', space=smem, size = 0x4, offset = 0x4, fixed_abs, tag = 'smem constant byte address 0x4 - core index']
  #allocation1 [shape = 'u32[144,128]{1,0:T(1,128)}', space=vmem, size = 0x12000, scoped, tag = 'internal scratch']
  %s0 = inlined_call_operand.hbm [shape: f32[8,128], index: 0, kind: input, shape index: {}]
  %s1 = inlined_call_operand.hbm [shape: f32[128,128], index: 1, kind: input, shape index: {}]
  %s2 = inlined_call_operand.hbm [shape: f32[8,128], index: 2, kind: output, shape index: {}]
  %s3 = sld [smem:[#allocation0]]
  $region26: #{tpu_custom_call.1} parent=0
    _
  %s5 = ssub.s32 1, %s3
  %s6 = scalar_select 0, %s5, %s3
  $region1: #{tpu_custom_call.1} parent=0
    #allocation2 [shape = 'u8[4096]{0}', space=vmem, size = 0x1000, scoped, tag = 'input window, operand 0, single buffered']
    #allocation3 [shape = 's32[1]{0}', space=sflag, size = 0x4, scoped, tag = 'scoped memory for tpu_custom_call.1']
    #allocation4 [shape = 's32[1]{0}', space=sflag, size = 0x4, scoped, tag = 'scoped memory for tpu_custom_call.1']
    #allocation5 [shape = 'u8[65536]{0}', space=vmem, size = 0x10000, scoped, tag = 'input window, operand 1, single buffered']
    #allocation6 [shape = 's32[1]{0}', space=sflag, size = 0x4, scoped, tag = 'scoped memory for tpu_custom_call.1']
    #allocation7 [shape = 'u8[4096]{0}', space=vmem, size = 0x1000, scoped, tag = 'output window, operand 0, single buffered']
    %7 = vsyncpa [#allocation3], 0
    %8 = vsyncpa [#allocation6], 0
    %9 = vsyncpa [#allocation4], 0
    // Predicated region
    $region2: #{tpu_custom_call.1} parent=1 // pred_check
      _
    $region3: #{tpu_custom_call.1} parent=1 // pred_check_branch
      %11 = sbr.rel (0) target = $region5
    $region4: #{tpu_custom_call.1} parent=1 // pred_region
      %s13 = ssub.s32 128, 128
      %14 = vsyncadd [#allocation3], %s13
      %s16 = sshll.u32 [#allocation2], 4
      %s17 = int_to_ptr.vmem [resolvable:$true] %s16
      %19 = dma.hbm_to_vmem [thread:$0]  %s0, 128, %s17, [#allocation3]
    $region5: #{tpu_custom_call.1} parent=1 // pred_fallthru
      _
    // Predicated region
    $region6: #{tpu_custom_call.1} parent=1 // pred_check
      _
    $region7: #{tpu_custom_call.1} parent=1 // pred_check_branch
      %21 = sbr.rel (0) target = $region9
    $region8: #{tpu_custom_call.1} parent=1 // pred_region
      %s23 = ssub.s32 2048, 2048
      %24 = vsyncadd [#allocation6], %s23
      %s25 = sshll.u32 [#allocation5], 4
      %s26 = int_to_ptr.vmem [resolvable:$true] %s25
      %31 = dma.hbm_to_vmem [thread:$0]  %s1, 2048, %s26, [#allocation6], 128, 128, 8
    $region9: #{tpu_custom_call.1} parent=1 // pred_fallthru
      _
    // Predicated region
    $region10: #{tpu_custom_call.1} parent=1 // pred_check
      _
    $region11: #{tpu_custom_call.1} parent=1 // pred_check_branch
      %33 = sbr.rel (0) target = $region13
    $region12: #{tpu_custom_call.1} parent=1 // pred_region
      %34 = dma.done [#allocation3], 128
    $region13: #{tpu_custom_call.1} parent=1 // pred_fallthru
      _
    // Predicated region
    $region14: #{tpu_custom_call.1} parent=1 // pred_check
      _
    $region15: #{tpu_custom_call.1} parent=1 // pred_check_branch
      %36 = sbr.rel (0) target = $region17
    $region16: #{tpu_custom_call.1} parent=1 // pred_region
      %37 = dma.done [#allocation6], 2048
    $region17: #{tpu_custom_call.1} parent=1 // pred_fallthru
      _
    %v38 = vld [vmem:[#allocation2] sm:$0xff]
    %v39 = vld [vmem:[#allocation5] sm:$0xff]
    %v40 = vld [vmem:[#allocation5 + $0x8] sm:$0xff]
    %v41 = vld [vmem:[#allocation5 + $0x10] sm:$0xff]
    %v42 = vld [vmem:[#allocation5 + $0x18] sm:$0xff]
    %v43 = vld [vmem:[#allocation5 + $0x20] sm:$0xff]
    %v44 = vld [vmem:[#allocation5 + $0x28] sm:$0xff]
    %v45 = vld [vmem:[#allocation5 + $0x30] sm:$0xff]
    %v46 = vld [vmem:[#allocation5 + $0x38] sm:$0xff]
    %v47 = vld [vmem:[#allocation5 + $0x40] sm:$0xff]
    %v48 = vld [vmem:[#allocation5 + $0x48] sm:$0xff]
    %v49 = vld [vmem:[#allocation5 + $0x50] sm:$0xff]
    %v50 = vld [vmem:[#allocation5 + $0x58] sm:$0xff]
    %v51 = vld [vmem:[#allocation5 + $0x60] sm:$0xff]
    %v52 = vld [vmem:[#allocation5 + $0x68] sm:$0xff]
    %v53 = vld [vmem:[#allocation5 + $0x70] sm:$0xff]
    %v54 = vld [vmem:[#allocation5 + $0x78] sm:$0xff]
    %55 = vmatprep.subr.mxu0 0.0
    %56 = vmatpush1.msra.mxu0 %v39
    %57 = vmatprep.subr.mxu0 0.0
    %58 = vmatpush1.msra.mxu0 %v40
    %59 = vmatprep.subr.mxu0 0.0
    %60 = vmatpush1.msra.mxu0 %v41
    %61 = vmatprep.subr.mxu0 0.0
    %62 = vmatpush1.msra.mxu0 %v42
    %63 = vmatprep.subr.mxu0 0.0
    %64 = vmatpush1.msra.mxu0 %v43
    %65 = vmatprep.subr.mxu0 0.0
    %66 = vmatpush1.msra.mxu0 %v44
    %67 = vmatprep.subr.mxu0 0.0
    %68 = vmatpush1.msra.mxu0 %v45
    %69 = vmatprep.subr.mxu0 0.0
    %70 = vmatpush1.msra.mxu0 %v46
    %71 = vmatprep.subr.mxu0 0.0
    %72 = vmatpush1.msra.mxu0 %v47
    %73 = vmatprep.subr.mxu0 0.0
    %74 = vmatpush1.msra.mxu0 %v48
    %75 = vmatprep.subr.mxu0 0.0
    %76 = vmatpush1.msra.mxu0 %v49
    %77 = vmatprep.subr.mxu0 0.0
    %78 = vmatpush1.msra.mxu0 %v50
    %79 = vmatprep.subr.mxu0 0.0
    %80 = vmatpush1.msra.mxu0 %v51
    %81 = vmatprep.subr.mxu0 0.0
    %82 = vmatpush1.msra.mxu0 %v52
    %83 = vmatprep.subr.mxu0 0.0
    %84 = vmatpush1.msra.mxu0 %v53
    %85 = vmatprep.subr.mxu0 0.0
    %86 = vmatpush1.msra.mxu0 %v54
    %87 = vmatprep.subr.mxu0 0.0
    %88 = vmatpush1.msra.mxu0 0.0
    %89 = vmatprep.subr.mxu0 0.0
    %90 = vmatpush1.msra.mxu0 0.0
    %91 = vmatprep.subr.mxu0 0.0
    %92 = vmatpush1.msra.mxu0 0.0
    %93 = vmatprep.subr.mxu0 0.0
    %94 = vmatpush1.msra.mxu0 0.0
    %95 = vmatprep.subr.mxu0 0.0
    %96 = vmatpush1.msra.mxu0 0.0
    %97 = vmatprep.subr.mxu0 0.0
    %98 = vmatpush1.msra.mxu0 0.0
    %99 = vmatprep.subr.mxu0 0.0
    %100 = vmatpush1.msra.mxu0 0.0
    %101 = vmatprep.subr.mxu0 0.0
    %102 = vmatpush1.msra.mxu0 0.0
    %103 = vmatprep.subr.mxu0 0.0
    %104 = vmatpush1.msra.mxu0 0.0
    %105 = vmatprep.subr.mxu0 0.0
    %106 = vmatpush1.msra.mxu0 0.0
    %107 = vmatprep.subr.mxu0 0.0
    %108 = vmatpush1.msra.mxu0 0.0
    %109 = vmatprep.subr.mxu0 0.0
    %110 = vmatpush1.msra.mxu0 0.0
    %111 = vmatprep.subr.mxu0 0.0
    %112 = vmatpush1.msra.mxu0 0.0
    %113 = vmatprep.subr.mxu0 0.0
    %114 = vmatpush1.msra.mxu0 0.0
    %115 = vmatprep.subr.mxu0 0.0
    %116 = vmatpush1.msra.mxu0 0.0
    %117 = vmatprep.subr.mxu0 0.0
    %118 = vmatpush1.msra.mxu0 0.0
    %119 = vmatprep.mubr.f32.mxu0 0.0
    %120 = vmatmul.mubr.f32.gmra.mrb[0].mxu0 %v38
    %v121 = vpop.f32.mrb[0].mxu0
    %v122 = vadd.f32 0.0, %v121
    %v123 = vpop.f32.mrb[0].mxu0
    %124 = vdwg.mxu0
    %125 = vst [vmem:[#allocation7] sm:$0xff] %v122
    // Predicated region
    $region18: #{tpu_custom_call.1} parent=1 // pred_check
      _
    $region19: #{tpu_custom_call.1} parent=1 // pred_check_branch
      %127 = sbr.rel (0) target = $region21
    $region20: #{tpu_custom_call.1} parent=1 // pred_region
      %s129 = ssub.s32 128, 128
      %130 = vsyncadd [#allocation4], %s129
      %s132 = sshll.u32 [#allocation7], 4
      %s133 = int_to_ptr.vmem [resolvable:$true] %s132
      %135 = dma.vmem_to_hbm [thread:$0]  %s133, 128, %s2, [#allocation4]
    $region21: #{tpu_custom_call.1} parent=1 // pred_fallthru
      _
    // Predicated region
    $region22: #{tpu_custom_call.1} parent=1 // pred_check
      _
    $region23: #{tpu_custom_call.1} parent=1 // pred_check_branch
      %137 = sbr.rel (0) target = $region25
    $region24: #{tpu_custom_call.1} parent=1 // pred_region
      %138 = dma.done [#allocation4], 128
    $region25: #{tpu_custom_call.1} parent=1 // pred_fallthru
      _
    %139 = vsyncpa [#allocation3], 1
    %140 = vsyncpa [#allocation6], 1
    %141 = vsyncpa [#allocation4], 1

</llo_original>
